<compile_context>
chip_gen: v6e
topology: v6e:2x2x1
jax: 0.10.0
libtpu: 0.0.40
codegen_flags: <defaults>
</compile_context>

<pallas_src>
import functools
import math

import jax
import jax.numpy as jnp
from jax.experimental import pallas as pl
from jax.experimental.pallas import tpu as pltpu


def _round_up(a, b):
    return ((a + b - 1) // b) * b


def _l2_normalize(v, eps=1e-12):
    # F.normalize(v, p=2, dim=-1, eps): v / max(||v||, eps).
    # rsqrt(max(sumsq, eps^2)) == 1 / max(||v||, eps).
    sumsq = jnp.sum(v * v, axis=-1, keepdims=True)
    return v * jax.lax.rsqrt(jnp.maximum(sumsq, eps * eps))


def _arcface_kernel(hit_ref, label_ref, x_ref, w_ref, out_ref,
                    *, s, s_cos_m, s_sin_m, s_m, th, easy_margin, tc):
    j = pl.program_id(0)   # class-tile index (outer; weight tile resident per j)
    i = pl.program_id(1)   # batch-tile index (inner; x/label streamed)

    # cosine = x_n @ w_n.T without materializing a transpose: contract the
    # last dim of both operands.  Operands are already L2-normalized (and by
    # default bf16); the MXU accumulates in f32.
    cosine = jax.lax.dot_general(
        x_ref[...], w_ref[...],
        dimension_numbers=(((1,), (1,)), ((), ())),
        preferred_element_type=jnp.float32)              # (TB, TC) f32
    scos = cosine * s                                     # scale applied once

    hit = hit_ref[i, j]

    @pl.when(hit == 0)
    def _():
        # No label of this batch tile falls inside this class tile:
        # the whole margin epilogue collapses to the plain scaled cosine.
        out_ref[...] = scos

    @pl.when(hit != 0)
    def _():
        # ArcFace margin with s folded into every select operand.
        # Clamp the sqrt argument: rounding can push |cosine| above 1.
        sine = jnp.sqrt(jnp.maximum(1.0 - cosine * cosine, 0.0))
        s_phi = cosine * s_cos_m - sine * s_sin_m         # = s * phi
        if easy_margin:
            s_phi = jnp.where(cosine > 0.0, s_phi, scos)
        else:
            s_phi = jnp.where(cosine > th, s_phi, scos - s_m)
        class_ids = j * tc + jax.lax.broadcasted_iota(jnp.int32, cosine.shape, 1)
        out_ref[...] = jnp.where(class_ids == label_ref[...], s_phi, scos)


def arcface_forward(x, weight, label, *, s=32.0, m=0.5, easy_margin=False,
                    block_b=256, block_c=1024, matmul_dtype=jnp.bfloat16):
    """ArcFace logits.

    x: (B, D) float32, weight: (C, D) float32, label: (B,) int class ids.
    Returns (B, C) float32 scaled logits matching the PyTorch module.
    """
    B, D = x.shape
    C, D_w = weight.shape
    assert D == D_w, "feature dims of x and weight must match"

    # Lane-dense padding: contraction dim and class dim to multiples of 128,
    # batch to a multiple of the B tile (>= 8 sublanes).
    D_pad = _round_up(D, 128)
    TB = min(block_b, _round_up(B, 8))
    B_pad = _round_up(B, TB)
    TC = min(block_c, _round_up(C, 128))
    C_pad = _round_up(C, TC)
    nb, nc = B_pad // TB, C_pad // TC

    # Normalize once here (hoisted out of the grid loop) and stream operands
    # in matmul_dtype (bf16 by default -> half the weight HBM bytes).
    x_n = _l2_normalize(x.astype(jnp.float32)).astype(matmul_dtype)
    w_n = _l2_normalize(weight.astype(jnp.float32)).astype(matmul_dtype)

    x_p = jnp.zeros((B_pad, D_pad), matmul_dtype).at[:B, :D].set(x_n)
    w_p = jnp.zeros((C_pad, D_pad), matmul_dtype).at[:C, :D].set(w_n)
    lab = (jnp.full((B_pad,), -1, dtype=jnp.int32)
           .at[:B].set(label.astype(jnp.int32)))
    lab_p = lab.reshape(B_pad, 1)

    # hit[i, j] = 1 iff batch tile i contains a label in class tile j.
    # Scalar-prefetched into SMEM; gates the margin epilogue in the kernel.
    # Padded labels are -1, so -1 // TC == -1 never matches a tile index.
    lab_tile = lab.reshape(nb, TB) // TC
    hit_tbl = (lab_tile[:, :, None]
               == jnp.arange(nc, dtype=jnp.int32)[None, None, :]
               ).any(axis=1).astype(jnp.int32)            # (nb, nc)

    kernel = functools.partial(
        _arcface_kernel,
        s=float(s),
        s_cos_m=float(s * math.cos(m)),
        s_sin_m=float(s * math.sin(m)),
        s_m=float(s * m),
        th=float(math.cos(math.pi - m)),
        easy_margin=bool(easy_margin),
        tc=TC,
    )

    # VMEM limit with headroom below physical capacity (v7x has only 64 MiB);
    # allow a larger limit on v5e/v6e (128 MiB) when the query is available.
    try:
        cap = pltpu.get_tpu_info().vmem_capacity_bytes
        vmem_limit = max(32 * 1024 * 1024,
                         min(cap - 16 * 1024 * 1024, 96 * 1024 * 1024))
    except Exception:
        vmem_limit = 48 * 1024 * 1024

    out = pl.pallas_call(
        kernel,
        out_shape=jax.ShapeDtypeStruct((B_pad, C_pad), jnp.float32),
        grid_spec=pltpu.PrefetchScalarGridSpec(
            num_scalar_prefetch=1,
            # B innermost: the (TC, D_pad) weight tile stays resident across
            # all batch tiles and is DMA'd from HBM exactly once.
            grid=(nc, nb),
            in_specs=[
                pl.BlockSpec((TB, 1), lambda j, i, hit: (i, 0)),       # labels
                pl.BlockSpec((TB, D_pad), lambda j, i, hit: (i, 0)),   # x (streamed)
                pl.BlockSpec((TC, D_pad), lambda j, i, hit: (j, 0)),   # weight (resident)
            ],
            out_specs=pl.BlockSpec((TB, TC), lambda j, i, hit: (i, j)),
        ),
        compiler_params=pltpu.CompilerParams(
            dimension_semantics=("parallel", "parallel"),
            vmem_limit_bytes=vmem_limit,
        ),
    )(hit_tbl, lab_p, x_p, w_p)

    return out[:B, :C]


def _reference(x, weight, label, *, s=32.0, m=0.5, easy_margin=False):
    # Pure-JAX reference mirroring the PyTorch forward, for a sanity check.
    eps = 1e-12
    x_n = x / jnp.maximum(jnp.linalg.norm(x, axis=1, keepdims=True), eps)
    w_n = weight / jnp.maximum(jnp.linalg.norm(weight, axis=1, keepdims=True), eps)
    cosine = x_n @ w_n.T
    sine = jnp.sqrt(jnp.maximum(1.0 - cosine ** 2, 0.0))
    phi = cosine * math.cos(m) - sine * math.sin(m)
    th = math.cos(math.pi - m)
    if easy_margin:
        phi = jnp.where(cosine > 0, phi, cosine)
    else:
        phi = jnp.where(cosine - th > 0, phi, cosine - m)
    one_hot = jax.nn.one_hot(label, cosine.shape[1], dtype=cosine.dtype)
    return (one_hot * phi + (1.0 - one_hot) * cosine) * s


if __name__ == "__main__":
    feature_dim = 32
    num_class = 200     # not a multiple of 128 -> exercises C padding
    batch = 16

    key = jax.random.PRNGKey(0)
    kx, kw, kl = jax.random.split(key, 3)

    # Deterministic init mirroring xavier_uniform_ for (num_class, feature_dim).
    bound = math.sqrt(6.0 / (num_class + feature_dim))
    weight = jax.random.uniform(kw, (num_class, feature_dim), jnp.float32,
                                minval=-bound, maxval=bound)
    x = jax.random.normal(kx, (batch, feature_dim), dtype=jnp.float32)
    label = jax.random.randint(kl, (batch,), 0, num_class, dtype=jnp.int32)

    # Small tiles so the 2-D grid (2 x 2), residency and hit-gating are exercised.
    ref = _reference(x, weight, label, s=32.0, m=0.5, easy_margin=False)

    # f32 matmul path: matches the reference tightly.
    out_f32 = arcface_forward(x, weight, label, s=32.0, m=0.5, easy_margin=False,
                              block_b=8, block_c=128, matmul_dtype=jnp.float32)
    out_f32 = jax.block_until_ready(out_f32)
    assert out_f32.shape == (batch, num_class)
    assert jnp.allclose(out_f32, ref, atol=1e-3, rtol=1e-3), "f32 mismatch vs reference"

    # Default bf16-streamed path: tolerance widened for bf16 operand rounding
    # (error ~1e-3 on cosine, scaled by s=32).
    out_bf16 = arcface_forward(x, weight, label, s=32.0, m=0.5, easy_margin=False,
                               block_b=8, block_c=128)
    out_bf16 = jax.block_until_ready(out_bf16)
    assert jnp.allclose(out_bf16, ref, atol=0.25, rtol=0.0), "bf16 mismatch vs reference"

    # easy_margin variant.
    ref_easy = _reference(x, weight, label, s=32.0, m=0.5, easy_margin=True)
    out_easy = arcface_forward(x, weight, label, s=32.0, m=0.5, easy_margin=True,
                               block_b=8, block_c=128, matmul_dtype=jnp.float32)
    out_easy = jax.block_until_ready(out_easy)
    assert jnp.allclose(out_easy, ref_easy, atol=1e-3, rtol=1e-3), "easy-margin mismatch"

    print("KERNEL_OK")
</pallas_src>

<mosaic_0001>
module attributes {stable_mosaic.version = 11 : i64} {
  func.func @_arcface_kernel(%arg0: i32, %arg1: i32, %arg2: memref<2x2xi32, #tpu.memory_space<smem>>, %arg3: memref<8x1xi32, #tpu.memory_space<vmem>>, %arg4: memref<8x128xf32, #tpu.memory_space<vmem>>, %arg5: memref<128x128xf32, #tpu.memory_space<vmem>>, %arg6: memref<8x128xf32, #tpu.memory_space<vmem>>) attributes {dimension_semantics = [#tpu.dimension_semantics<parallel>, #tpu.dimension_semantics<parallel>], iteration_bounds = array<i64: 2, 2>, scalar_prefetch = 1 : i64, scratch_operands = 0 : i64, tpu.core_type = #tpu.core_type<tc>, window_params = [{transform_indices = @transform_0, window_bounds = array<i64: 8, 1>}, {transform_indices = @transform_1, window_bounds = array<i64: 8, 128>}, {transform_indices = @transform_2, window_bounds = array<i64: 128, 128>}, {transform_indices = @transform_3, window_bounds = array<i64: 8, 128>}]} {
    %c0 = arith.constant 0 : index
    %c0_0 = arith.constant 0 : index
    %0 = vector.load %arg4[%c0, %c0_0] : memref<8x128xf32, #tpu.memory_space<vmem>>, vector<8x128xf32>
    %c0_1 = arith.constant 0 : index
    %c0_2 = arith.constant 0 : index
    %1 = vector.load %arg5[%c0_1, %c0_2] : memref<128x128xf32, #tpu.memory_space<vmem>>, vector<128x128xf32>
    %cst = arith.constant dense<0.000000e+00> : vector<8x128xf32>
    %2 = tpu.matmul %0, %1, %cst {dimension_numbers = #tpu.dot_dimension_numbers<[1], [1], [0], [0], [0, 0, 1, 0], [], []>} : vector<8x128xf32>, vector<128x128xf32>, vector<8x128xf32> -> vector<8x128xf32>
    %cst_3 = arith.constant 3.200000e+01 : f32
    %3 = vector.broadcast %cst_3 : f32 to vector<8x128xf32>
    %4 = arith.mulf %2, %3 : vector<8x128xf32>
    %5 = arith.index_cast %arg1 : i32 to index
    %6 = arith.index_cast %arg0 : i32 to index
    %7 = memref.load %arg2[%5, %6] : memref<2x2xi32, #tpu.memory_space<smem>>
    %c0_i32 = arith.constant 0 : i32
    %8 = arith.cmpi eq, %7, %c0_i32 : i32
    %9 = arith.extui %8 : i1 to i32
    %c0_i32_4 = arith.constant 0 : i32
    %10 = arith.cmpi ne, %9, %c0_i32_4 : i32
    scf.if %10 {
      %c0_7 = arith.constant 0 : index
      %c0_8 = arith.constant 0 : index
      %14 = vector.load %arg6[%c0_7, %c0_8] : memref<8x128xf32, #tpu.memory_space<vmem>>, vector<8x128xf32>
      tpu.vector_store %arg6[%c0_7, %c0_8], %4 {strides = array<i32>} : memref<8x128xf32, #tpu.memory_space<vmem>>, vector<8x128xf32>,
    } else {
    }
    %c0_i32_5 = arith.constant 0 : i32
    %11 = arith.cmpi ne, %7, %c0_i32_5 : i32
    %12 = arith.extui %11 : i1 to i32
    %c0_i32_6 = arith.constant 0 : i32
    %13 = arith.cmpi ne, %12, %c0_i32_6 : i32
    scf.if %13 {
      %14 = arith.mulf %2, %2 : vector<8x128xf32>
      %cst_7 = arith.constant 1.000000e+00 : f32
      %15 = vector.broadcast %cst_7 : f32 to vector<8x128xf32>
      %16 = arith.subf %15, %14 : vector<8x128xf32>
      %cst_8 = arith.constant 0.000000e+00 : f32
      %17 = vector.broadcast %cst_8 : f32 to vector<8x128xf32>
      %18 = arith.maximumf %16, %17 : vector<8x128xf32>
      %19 = math.sqrt %18 : vector<8x128xf32>
      %cst_9 = arith.constant 28.0826416 : f32
      %20 = vector.broadcast %cst_9 : f32 to vector<8x128xf32>
      %21 = arith.mulf %2, %20 : vector<8x128xf32>
      %cst_10 = arith.constant 15.3416176 : f32
      %22 = vector.broadcast %cst_10 : f32 to vector<8x128xf32>
      %23 = arith.mulf %19, %22 : vector<8x128xf32>
      %24 = arith.subf %21, %23 : vector<8x128xf32>
      %cst_11 = arith.constant -0.87758255 : f32
      %25 = vector.broadcast %cst_11 : f32 to vector<8x128xf32>
      %26 = arith.cmpf ogt, %2, %25 : vector<8x128xf32>
      %cst_12 = arith.constant 1.600000e+01 : f32
      %27 = vector.broadcast %cst_12 : f32 to vector<8x128xf32>
      %28 = arith.subf %4, %27 : vector<8x128xf32>
      %29 = arith.select %26, %24, %28 : vector<8x128xi1>, vector<8x128xf32>
      %c128_i32 = arith.constant 128 : i32
      %30 = arith.muli %arg0, %c128_i32 : i32
      %31 = tpu.iota {dimensions = array<i32: 1>} : vector<8x128xi32>
      %32 = vector.broadcast %30 : i32 to vector<8x128xi32>
      %33 = arith.addi %32, %31 : vector<8x128xi32>
      %c0_13 = arith.constant 0 : index
      %c0_14 = arith.constant 0 : index
      %34 = vector.load %arg3[%c0_13, %c0_14] : memref<8x1xi32, #tpu.memory_space<vmem>>, vector<8x1xi32>
      %35 = vector.broadcast %34 : vector<8x1xi32> to vector<8x128xi32>
      %36 = arith.cmpi eq, %33, %35 : vector<8x128xi32>
      %37 = arith.select %36, %29, %4 : vector<8x128xi1>, vector<8x128xf32>
      %c0_15 = arith.constant 0 : index
      %c0_16 = arith.constant 0 : index
      %38 = vector.load %arg6[%c0_15, %c0_16] : memref<8x128xf32, #tpu.memory_space<vmem>>, vector<8x128xf32>
      tpu.vector_store %arg6[%c0_15, %c0_16], %37 {strides = array<i32>} : memref<8x128xf32, #tpu.memory_space<vmem>>, vector<8x128xf32>,
    } else {
    }
    return
  }
  func.func @transform_0(%arg0: i32, %arg1: i32, %arg2: memref<2x2xi32, #tpu.memory_space<smem>>) -> (i32, i32) {
    %c0_i32 = arith.constant 0 : i32
    %c0_i32_0 = arith.constant 0 : i32
    return %arg1, %c0_i32 : i32, i32
  }
  func.func @transform_1(%arg0: i32, %arg1: i32, %arg2: memref<2x2xi32, #tpu.memory_space<smem>>) -> (i32, i32) {
    %c0_i32 = arith.constant 0 : i32
    %c0_i32_0 = arith.constant 0 : i32
    return %arg1, %c0_i32 : i32, i32
  }
  func.func @transform_2(%arg0: i32, %arg1: i32, %arg2: memref<2x2xi32, #tpu.memory_space<smem>>) -> (i32, i32) {
    %c0_i32 = arith.constant 0 : i32
    %c0_i32_0 = arith.constant 0 : i32
    return %arg0, %c0_i32 : i32, i32
  }
  func.func @transform_3(%arg0: i32, %arg1: i32, %arg2: memref<2x2xi32, #tpu.memory_space<smem>>) -> (i32, i32) {
    %c0_i32 = arith.constant 0 : i32
    return %arg1, %arg0 : i32, i32
  }
}

</mosaic_0001>

<llo_original>
// kernel: tpu_custom_call.1
$region0: #{tpu_custom_call.1}
  #allocation0 [shape = 'u32[]', space=smem, size = 0x4, offset = 0x4, fixed_abs, tag = 'smem constant byte address 0x4 - core index']
  #allocation1 [shape = 'u32[144,128]{1,0:T(1,128)}', space=vmem, size = 0x12000, scoped, tag = 'internal scratch']
  #allocation2 [shape = 's32[1]{0}', space=sflag, size = 0x4, scoped, tag = 'scoped memory for tpu_custom_call.1']
  #allocation3 [shape = 'u8[1024]{0}', space=smem, size = 0x400, scoped, tag = 'prefetched SMEM operand 0']
  %s0 = inlined_call_operand.vmem [shape: s32[2,2], index: 0, kind: input, shape index: {}]
  %s1 = inlined_call_operand.vmem [shape: s32[16,1], index: 1, kind: input, shape index: {}]
  %s2 = inlined_call_operand.vmem [shape: f32[16,128], index: 2, kind: input, shape index: {}]
  %s3 = inlined_call_operand.hbm [shape: f32[256,128], index: 3, kind: input, shape index: {}]
  %s4 = inlined_call_operand.hbm [shape: f32[16,256], index: 4, kind: output, shape index: {}]
  %s5 = sld [smem:[#allocation0]]
  $region57: #{tpu_custom_call.1} parent=0
    _
  %s7 = ssub.s32 1, %s5
  %s8 = scalar_select 0, %s7, %s5
  %s9 = sshll.u32 %s0, 4
  %s10 = int_to_ptr.vmem [resolvable:$true] %s9
  %12 = dma.vmem_to_smem %s10, 32, [#allocation3], [#allocation2]
  %13 = dma.done [#allocation2], 32
  %14 = sfence
  $region1: #{tpu_custom_call.1} parent=0
    #allocation4 [shape = 'u8[131072]{0}', space=vmem, size = 0x20000, scoped, tag = 'input window, operand 3']
    #allocation5 [shape = 's32[2]{0}', space=sflag, size = 0x8, scoped, tag = 'scoped memory for tpu_custom_call.1']
    #allocation6 [shape = 's32[2]{0}', space=sflag, size = 0x8, scoped, tag = 'scoped memory for tpu_custom_call.1']
    #allocation7 [shape = 'u8[8192]{0}', space=vmem, size = 0x2000, scoped, tag = 'output window, operand 0']
    %15 = vsyncpa [#allocation5], 0
    %s16 = scalar_lea.sflag [#allocation5], 1
    %17 = vsyncpa %s16, 0
    %18 = vsyncpa [#allocation6], 0
    %s19 = scalar_lea.sflag [#allocation6], 1
    %20 = vsyncpa %s19, 0
    loop: start=0, step=1, limit=6
    $region2: #{tpu_custom_call.1} parent=1 // loop_pre_header
      _
    $region3: #{tpu_custom_call.1} parent=1 // loop_header
      %s22 = sphi 0, %s26
      %p23 = scmp.ge.s32.totalorder %s22, 6
      %s29 = sphi 0, %s41
      %s30 = sphi 0, %s37
      %s31 = sphi 0, %s29
      %s32 = sphi 0, %s30
      %s33 = sphi 0, %s31
      %s34 = sphi 0, %s32
      %s44 = sphi 0, %s46
      %s47 = sphi 0, %s44
      %s48 = sphi 0, %s47
      %s64 = sphi 0, %s48
      %s70 = sphi 0, %s72
      %s73 = sphi 0, %s70
      %s74 = sphi 0, %s73
      %s90 = sphi 0, %s74
      %s96 = sphi 0, %s98
      %s99 = sphi 0, %s96
      %s100 = sphi 0, %s99
      %s116 = sphi 0, %s100
      %s124 = sphi 0, %s126
      %s127 = sphi 0, %s124
      %s128 = sphi 0, %s127
      %s144 = sphi 0, %s128
    $region4: #{tpu_custom_call.1} parent=1 // loop_header_branch
      %25 = sbr.rel (%p23) target = $region8
    $region5: #{tpu_custom_call.1} parent=1 // loop_body
      %s27 = ssub.s32 %s22, 1
      %s28 = ssub.s32 %s22, 2
      %s35 = sadd.s32 1, %s30
      %p36 = scmp.ge.s32.totalorder %s35, 2
      %s37 = scalar_select %p36, 0, %s35
      %s38 = sadd.s32 1, %s29
      %s39 = scalar_select %p36, %s38, %s29
      %p40 = scmp.ge.s32.totalorder %s39, 2
      %s41 = scalar_select %p40, 0, %s39
      %s42 = ssub.s32 %s30, %s37
      %p43 = scmp.eq.s32.totalorder %s42, 0
      %s45 = sadd.s32 %s44, 1
      %s46 = scalar_select %p43, %s44, %s45
      %p49 = pneg %p43
      %p50 = scmp.eq.s32.totalorder %s22, 3
      %p51 = por %p49, %p50
      %p52 = scmp.ne.s32.totalorder %s44, %s47
      %p53 = scmp.eq.s32.totalorder %s22, 0
      %p54 = por %p52, %p53
      %p55 = scmp.ne.s32.totalorder %s44, %s47
      %p56 = scmp.eq.s32.totalorder %s27, 3
      %p57 = por %p55, %p56
      %p58 = scmp.ne.s32.totalorder %s47, %s48
      %p59 = scmp.eq.s32.totalorder %s27, 0
      %p60 = por %p58, %p59
      %p61 = scmp.ne.s32.totalorder %s47, %s48
      %p62 = scmp.eq.s32.totalorder %s28, 3
      %p63 = por %p61, %p62
      %p65 = scmp.ne.s32.totalorder %s48, %s64
      %p66 = scmp.eq.s32.totalorder %s28, 0
      %p67 = por %p65, %p66
      %s68 = ssub.s32 %s30, %s37
      %p69 = scmp.eq.s32.totalorder %s68, 0
      %s71 = sadd.s32 %s70, 1
      %s72 = scalar_select %p69, %s70, %s71
      %p75 = pneg %p69
      %p76 = scmp.eq.s32.totalorder %s22, 3
      %p77 = por %p75, %p76
      %p78 = scmp.ne.s32.totalorder %s70, %s73
      %p79 = scmp.eq.s32.totalorder %s22, 0
      %p80 = por %p78, %p79
      %p81 = scmp.ne.s32.totalorder %s70, %s73
      %p82 = scmp.eq.s32.totalorder %s27, 3
      %p83 = por %p81, %p82
      %p84 = scmp.ne.s32.totalorder %s73, %s74
      %p85 = scmp.eq.s32.totalorder %s27, 0
      %p86 = por %p84, %p85
      %p87 = scmp.ne.s32.totalorder %s73, %s74
      %p88 = scmp.eq.s32.totalorder %s28, 3
      %p89 = por %p87, %p88
      %p91 = scmp.ne.s32.totalorder %s74, %s90
      %p92 = scmp.eq.s32.totalorder %s28, 0
      %p93 = por %p91, %p92
      %s94 = ssub.s32 %s29, %s41
      %p95 = scmp.eq.s32.totalorder %s94, 0
      %s97 = sadd.s32 %s96, 1
      %s98 = scalar_select %p95, %s96, %s97
      %p101 = pneg %p95
      %p102 = scmp.eq.s32.totalorder %s22, 3
      %p103 = por %p101, %p102
      %p104 = scmp.ne.s32.totalorder %s96, %s99
      %p105 = scmp.eq.s32.totalorder %s22, 0
      %p106 = por %p104, %p105
      %p107 = scmp.ne.s32.totalorder %s96, %s99
      %p108 = scmp.eq.s32.totalorder %s27, 3
      %p109 = por %p107, %p108
      %p110 = scmp.ne.s32.totalorder %s99, %s100
      %p111 = scmp.eq.s32.totalorder %s27, 0
      %p112 = por %p110, %p111
      %p113 = scmp.ne.s32.totalorder %s99, %s100
      %p114 = scmp.eq.s32.totalorder %s28, 3
      %p115 = por %p113, %p114
      %p117 = scmp.ne.s32.totalorder %s100, %s116
      %p118 = scmp.eq.s32.totalorder %s28, 0
      %p119 = por %p117, %p118
      %s120 = ssub.s32 %s30, %s37
      %s121 = ssub.s32 %s29, %s41
      %s122 = sor.u32 %s120, %s121
      %p123 = scmp.eq.s32.totalorder %s122, 0
      %s125 = sadd.s32 %s124, 1
      %s126 = scalar_select %p123, %s124, %s125
      %p129 = pneg %p123
      %p130 = scmp.eq.s32.totalorder %s22, 3
      %p131 = por %p129, %p130
      %p132 = scmp.ne.s32.totalorder %s124, %s127
      %p133 = scmp.eq.s32.totalorder %s22, 0
      %p134 = por %p132, %p133
      %p135 = scmp.ne.s32.totalorder %s124, %s127
      %p136 = scmp.eq.s32.totalorder %s27, 3
      %p137 = por %p135, %p136
      %p138 = scmp.ne.s32.totalorder %s127, %s128
      %p139 = scmp.eq.s32.totalorder %s27, 0
      %p140 = por %p138, %p139
      %p141 = scmp.ne.s32.totalorder %s127, %s128
      %p142 = scmp.eq.s32.totalorder %s28, 3
      %p143 = por %p141, %p142
      %p145 = scmp.ne.s32.totalorder %s128, %s144
      %p146 = scmp.eq.s32.totalorder %s28, 0
      %p147 = por %p145, %p146
      %p148 = scmp.le.s32.totalorder 1, %s22
      %p149 = scmp.lt.s32.totalorder %s22, 5
      %p150 = pnand %p148, %p149
      %p151 = pneg %p150
      // Predicated region
      $region9: #{tpu_custom_call.1} parent=5 // pred_check
        _
      $region10: #{tpu_custom_call.1} parent=5 // pred_check_branch
        %153 = sbr.rel (%p150) target = $region12
      $region11: #{tpu_custom_call.1} parent=5 // pred_region
        %s154 = ssub.s32 %s22, 1
      $region12: #{tpu_custom_call.1} parent=5 // pred_fallthru
        _
      %p155 = scmp.lt.s32.totalorder %s22, 4
      // Predicated region
      $region13: #{tpu_custom_call.1} parent=5 // pred_check
        %p156 = pneg %p155
      $region14: #{tpu_custom_call.1} parent=5 // pred_check_branch
        %158 = sbr.rel (%p156) target = $region16
      $region15: #{tpu_custom_call.1} parent=5 // pred_region
        // Predicated region
        $region17: #{tpu_custom_call.1} parent=15 // pred_check
          %p159 = pneg %p54
        $region18: #{tpu_custom_call.1} parent=15 // pred_check_branch
          %161 = sbr.rel (%p159) target = $region20
        $region19: #{tpu_custom_call.1} parent=15 // pred_region
          %p162 = scmp.lt.s32.totalorder %s30, 1
          %s163 = scalar_select %p162, %s30, 1
          %s164 = smul.addr %s163, 8
          %s165 = scalar_lea.vmem %s1, %s164
        $region20: #{tpu_custom_call.1} parent=15 // pred_fallthru
          _
        // Predicated region
        $region21: #{tpu_custom_call.1} parent=15 // pred_check
          %p166 = pneg %p80
        $region22: #{tpu_custom_call.1} parent=15 // pred_check_branch
          %168 = sbr.rel (%p166) target = $region24
        $region23: #{tpu_custom_call.1} parent=15 // pred_region
          %p169 = scmp.lt.s32.totalorder %s30, 1
          %s170 = scalar_select %p169, %s30, 1
          %s171 = smul.addr %s170, 8
          %s172 = scalar_lea.vmem %s2, %s171
        $region24: #{tpu_custom_call.1} parent=15 // pred_fallthru
          _
        // Predicated region
        $region25: #{tpu_custom_call.1} parent=15 // pred_check
          %p173 = pneg %p106
        $region26: #{tpu_custom_call.1} parent=15 // pred_check_branch
          %175 = sbr.rel (%p173) target = $region28
        $region27: #{tpu_custom_call.1} parent=15 // pred_region
          %s176 = sand.u32 %s96, 1
          %s177 = scalar_lea.sflag [#allocation5], %s176
          %s178 = sand.u32 %s96, 1
          %s179 = smul.addr %s178, 128
          %s180 = scalar_lea.vmem [#allocation4], %s179
          %s181 = smul.u32 16, %s29
          %s183 = ssub.s32 2048, 2048
          %184 = vsyncadd %s177, %s183
          %s185 = smul.addr %s181, 128
          %s186 = scalar_lea.hbm %s3, %s185
          %s187 = sshll.u32 %s180, 4
          %s188 = int_to_ptr.vmem [resolvable:$true] %s187
          %193 = dma.hbm_to_vmem [thread:$0]  %s186, 2048, %s188, %s177, 128, 128, 8
        $region28: #{tpu_custom_call.1} parent=15 // pred_fallthru
          _
      $region16: #{tpu_custom_call.1} parent=5 // pred_fallthru
        _
      %p194 = scmp.le.s32.totalorder 1, %s22
      %p195 = scmp.lt.s32.totalorder %s22, 5
      %p196 = pnand %p194, %p195
      %p197 = pneg %p196
      // Predicated region
      $region29: #{tpu_custom_call.1} parent=5 // pred_check
        _
      $region30: #{tpu_custom_call.1} parent=5 // pred_check_branch
        %199 = sbr.rel (%p196) target = $region32
      $region31: #{tpu_custom_call.1} parent=5 // pred_region
        %s200 = ssub.s32 %s22, 1
        %s201 = sand.u32 %s99, 1
        %s202 = scalar_lea.sflag [#allocation5], %s201
        %s203 = sand.u32 %s99, 1
        %s204 = smul.addr %s203, 128
        %s205 = scalar_lea.vmem [#allocation4], %s204
        // Predicated region
        $region33: #{tpu_custom_call.1} parent=31 // pred_check
          %p206 = pneg %p112
        $region34: #{tpu_custom_call.1} parent=31 // pred_check_branch
          %208 = sbr.rel (%p206) target = $region36
        $region35: #{tpu_custom_call.1} parent=31 // pred_region
          %209 = dma.done %s202, 2048
        $region36: #{tpu_custom_call.1} parent=31 // pred_fallthru
          _
        %p210 = scmp.lt.s32.totalorder %s32, 1
        %s211 = scalar_select %p210, %s32, 1
        %s212 = smul.addr %s211, 8
        %s213 = scalar_lea.vmem %s1, %s212
        %p214 = pneg %p60
        %p215 = pneg %p57
        %p216 = scmp.lt.s32.totalorder %s32, 1
        %s217 = scalar_select %p216, %s32, 1
        %s218 = smul.addr %s217, 8
        %s219 = scalar_lea.vmem %s2, %s218
        %p220 = pneg %p86
        %p221 = pneg %p83
        %s222 = sand.u32 %s99, 1
        %s223 = scalar_lea.sflag [#allocation5], %s222
        %s224 = sand.u32 %s99, 1
        %s225 = smul.addr %s224, 128
        %s226 = scalar_lea.vmem [#allocation4], %s225
        %p227 = pneg %p112
        %p228 = pneg %p109
        %p229 = pneg %p140
        %p230 = pneg %p137
        %s231 = sand.u32 %s127, 1
        %s232 = scalar_lea.sflag [#allocation6], %s231
        %s233 = sand.u32 %s127, 1
        %s234 = smul.addr %s233, 8
        %s235 = scalar_lea.vmem [#allocation7], %s234
        %p236 = scmp.lt.s32.totalorder %s32, 1
        %s237 = scalar_select %p236, %s32, 1
        %s238 = smul.addr %s237, 8
        %s239 = scalar_lea.vmem %s1, %s238
        %p240 = scmp.lt.s32.totalorder %s32, 1
        %s241 = scalar_select %p240, %s32, 1
        %s242 = smul.addr %s241, 8
        %s243 = scalar_lea.vmem %s2, %s242
        %s244 = smul.u32 16, %s31
        %v245 = vld [vmem:[%s243] sm:$0xff]
        %v246 = vld [vmem:[%s205] sm:$0xff]
        %v247 = vld [vmem:[%s205 + $0x8] sm:$0xff]
        %v248 = vld [vmem:[%s205 + $0x10] sm:$0xff]
        %v249 = vld [vmem:[%s205 + $0x18] sm:$0xff]
        %v250 = vld [vmem:[%s205 + $0x20] sm:$0xff]
        %v251 = vld [vmem:[%s205 + $0x28] sm:$0xff]
        %v252 = vld [vmem:[%s205 + $0x30] sm:$0xff]
        %v253 = vld [vmem:[%s205 + $0x38] sm:$0xff]
        %v254 = vld [vmem:[%s205 + $0x40] sm:$0xff]
        %v255 = vld [vmem:[%s205 + $0x48] sm:$0xff]
        %v256 = vld [vmem:[%s205 + $0x50] sm:$0xff]
        %v257 = vld [vmem:[%s205 + $0x58] sm:$0xff]
        %v258 = vld [vmem:[%s205 + $0x60] sm:$0xff]
        %v259 = vld [vmem:[%s205 + $0x68] sm:$0xff]
        %v260 = vld [vmem:[%s205 + $0x70] sm:$0xff]
        %v261 = vld [vmem:[%s205 + $0x78] sm:$0xff]
        %262 = vmatprep.subr.mxu0 0.0
        %263 = vmatpush1.xpose.msra.mxu0 %v261
        %264 = vmatprep.subr.mxu0 0.0
        %265 = vmatpush1.xpose.msra.mxu0 %v260
        %266 = vmatprep.subr.mxu0 0.0
        %267 = vmatpush1.xpose.msra.mxu0 %v259
        %268 = vmatprep.subr.mxu0 0.0
        %269 = vmatpush1.xpose.msra.mxu0 %v258
        %270 = vmatprep.subr.mxu0 0.0
        %271 = vmatpush1.xpose.msra.mxu0 %v257
        %272 = vmatprep.subr.mxu0 0.0
        %273 = vmatpush1.xpose.msra.mxu0 %v256
        %274 = vmatprep.subr.mxu0 0.0
        %275 = vmatpush1.xpose.msra.mxu0 %v255
        %276 = vmatprep.subr.mxu0 0.0
        %277 = vmatpush1.xpose.msra.mxu0 %v254
        %278 = vmatprep.subr.mxu0 0.0
        %279 = vmatpush1.xpose.msra.mxu0 %v253
        %280 = vmatprep.subr.mxu0 0.0
        %281 = vmatpush1.xpose.msra.mxu0 %v252
        %282 = vmatprep.subr.mxu0 0.0
        %283 = vmatpush1.xpose.msra.mxu0 %v251
        %284 = vmatprep.subr.mxu0 0.0
        %285 = vmatpush1.xpose.msra.mxu0 %v250
        %286 = vmatprep.subr.mxu0 0.0
        %287 = vmatpush1.xpose.msra.mxu0 %v249
        %288 = vmatprep.subr.mxu0 0.0
        %289 = vmatpush1.xpose.msra.mxu0 %v248
        %290 = vmatprep.subr.mxu0 0.0
        %291 = vmatpush1.xpose.msra.mxu0 %v247
        %292 = vmatprep.subr.mxu0 0.0
        %293 = vmatpush1.xpose.msra.mxu0 %v246
        %294 = vmatprep.subr.mxu0 0.0
        %295 = vmatpush2.xpose.msra.mxu0 0.0
        %296 = vmatprep.subr.mxu0 0.0
        %297 = vmatpush2.xpose.msra.mxu0 0.0
        %298 = vmatprep.subr.mxu0 0.0
        %299 = vmatpush2.xpose.msra.mxu0 0.0
        %300 = vmatprep.subr.mxu0 0.0
        %301 = vmatpush2.xpose.msra.mxu0 0.0
        %302 = vmatprep.subr.mxu0 0.0
        %303 = vmatpush2.xpose.msra.mxu0 0.0
        %304 = vmatprep.subr.mxu0 0.0
        %305 = vmatpush2.xpose.msra.mxu0 0.0
        %306 = vmatprep.subr.mxu0 0.0
        %307 = vmatpush2.xpose.msra.mxu0 0.0
        %308 = vmatprep.subr.mxu0 0.0
        %309 = vmatpush2.xpose.msra.mxu0 0.0
        %310 = vmatprep.subr.mxu0 0.0
        %311 = vmatpush2.xpose.msra.mxu0 0.0
        %312 = vmatprep.subr.mxu0 0.0
        %313 = vmatpush2.xpose.msra.mxu0 0.0
        %314 = vmatprep.subr.mxu0 0.0
        %315 = vmatpush2.xpose.msra.mxu0 0.0
        %316 = vmatprep.subr.mxu0 0.0
        %317 = vmatpush2.xpose.msra.mxu0 0.0
        %318 = vmatprep.subr.mxu0 0.0
        %319 = vmatpush2.xpose.msra.mxu0 0.0
        %320 = vmatprep.subr.mxu0 0.0
        %321 = vmatpush2.xpose.msra.mxu0 0.0
        %322 = vmatprep.subr.mxu0 0.0
        %323 = vmatpush2.xpose.msra.mxu0 0.0
        %324 = vmatprep.subr.mxu0 0.0
        %325 = vmatpush2.xpose.msra.mxu0 0.0
        %326 = vmatprep.mubr.f32.mxu0 0.0
        %327 = vmatmul.mubr.f32.gmra.mxu0 %v245
        %v328 = vpop.f32.mrf.mxu0
        %v329 = vadd.f32 0.0, %v328
        %v330 = vpop.f32.mrf.mxu0
        %331 = vdwg.mxu0
        %v332 = vmul.f32 %v329, 32.0
        %s333 = sshra.s32 %s31, 7
        %s334 = sand.u32 %s31, 127
        %s335 = sadd.s32 %s333, %s32
        %s336 = smul.u32 %s335, 128
        %s337 = sshra.s32 %s31, 7
        %s338 = sand.u32 %s31, 127
        %s339 = sadd.s32 %s336, %s338
        %s340 = sld [smem:[#allocation3 + %s339]]
        %p341 = scmp.eq.s32.totalorder %s340, 0
        // Predicated region
        $region37: #{tpu_custom_call.1} parent=31 // pred_check
          %p342 = pneg %p341
        $region38: #{tpu_custom_call.1} parent=31 // pred_check_branch
          %344 = sbr.rel (%p342) target = $region40
        $region39: #{tpu_custom_call.1} parent=31 // pred_region
          %345 = vst [vmem:[%s235] sm:$0xff] %v332
        $region40: #{tpu_custom_call.1} parent=31 // pred_fallthru
          _
        %p346 = scmp.ne.s32.totalorder %s340, 0
        // Predicated region
        $region41: #{tpu_custom_call.1} parent=31 // pred_check
          %p347 = pneg %p346
        $region42: #{tpu_custom_call.1} parent=31 // pred_check_branch
          %349 = sbr.rel (%p347) target = $region44
        $region43: #{tpu_custom_call.1} parent=31 // pred_region
          %v350 = vmul.f32 %v329, %v329
          %v351 = vsub.f32 1.0, %v350
          %v352 = vmax.f32 %v351, 0.0
          %v353 = vrsqrt.pop %v352
          %v354 = vmul.f32 %v352, %v353
          %vm355 = vcmp.eq.f32.partialorder %v352, inf
          %v356 = vsel %vm355, %v352, %v354
          %vm357 = vcmp.eq.f32.partialorder %v352, 0.0
          %v358 = vand.u32 %v352, 2147483648
          %v359 = vsel %vm357, %v358, %v356
          %v360 = vmul.f32 %v329, 28.082642
          %v361 = vmul.f32 %v359, 15.341618
          %v362 = vsub.f32 %v360, %v361
          %vm363 = vcmp.gt.f32.partialorder %v329, -0.87758255
          %v364 = vsub.f32 %v332, 16.0
          %v365 = vsel %vm363, %v362, %v364
          %s366 = smul.u32 %s31, 128
          %v367 = vlaneseq
          %v368 = vand.u32 %v367, 127
          %v369 = vstv %s366
          %v370 = vadd.s32 %v369, %v368
          %v371 = vld [vmem:[%s239] sm:$0xff]
          %372 = vset.pattern.permute.xlu0 0
          %373 = vperm.xlu0 %372, %v371
          %v374 = vpop.permute.xlu0 %373
          %vm375 = vcmp.eq.s32.totalorder %v370, %v374
          %v376 = vsel %vm375, %v365, %v332
          %377 = vst [vmem:[%s235] sm:$0xff] %v376
        $region44: #{tpu_custom_call.1} parent=31 // pred_fallthru
          _
        %s378 = sand.u32 %s127, 1
        %s379 = scalar_lea.sflag [#allocation6], %s378
        %s380 = sand.u32 %s127, 1
        %s381 = smul.addr %s380, 8
        %s382 = scalar_lea.vmem [#allocation7], %s381
        // Predicated region
        $region45: #{tpu_custom_call.1} parent=31 // pred_check
          %p383 = pneg %p137
        $region46: #{tpu_custom_call.1} parent=31 // pred_check_branch
          %385 = sbr.rel (%p383) target = $region48
        $region47: #{tpu_custom_call.1} parent=31 // pred_region
          %s387 = ssub.s32 128, 128
          %388 = vsyncadd %s379, %s387
          %s389 = smul.addr %s32, 2
          %s390 = sadd.s32 %s31, %s389
          %s391 = smul.addr %s390, 128
          %s392 = scalar_lea.hbm %s4, %s391
          %s394 = sshll.u32 %s382, 4
          %s395 = int_to_ptr.vmem [resolvable:$true] %s394
          %397 = dma.vmem_to_hbm [thread:$0]  %s395, 128, %s392, %s379
        $region48: #{tpu_custom_call.1} parent=31 // pred_fallthru
          _
      $region32: #{tpu_custom_call.1} parent=5 // pred_fallthru
        _
      %p398 = scmp.le.s32.totalorder 2, %s22
      // Predicated region
      $region49: #{tpu_custom_call.1} parent=5 // pred_check
        %p399 = pneg %p398
      $region50: #{tpu_custom_call.1} parent=5 // pred_check_branch
        %401 = sbr.rel (%p399) target = $region52
      $region51: #{tpu_custom_call.1} parent=5 // pred_region
        %s402 = ssub.s32 %s22, 2
        // Predicated region
        $region53: #{tpu_custom_call.1} parent=51 // pred_check
          %p403 = pneg %p143
        $region54: #{tpu_custom_call.1} parent=51 // pred_check_branch
          %405 = sbr.rel (%p403) target = $region56
        $region55: #{tpu_custom_call.1} parent=51 // pred_region
          %s406 = sand.u32 %s128, 1
          %s407 = scalar_lea.sflag [#allocation6], %s406
          %s408 = sand.u32 %s128, 1
          %s409 = smul.addr %s408, 8
          %s410 = scalar_lea.vmem [#allocation7], %s409
          %411 = dma.done %s407, 128
        $region56: #{tpu_custom_call.1} parent=51 // pred_fallthru
          _
      $region52: #{tpu_custom_call.1} parent=5 // pred_fallthru
        _
    $region6: #{tpu_custom_call.1} parent=1 // loop_footer
      %s26 = sadd.s32 1, %s22
    $region7: #{tpu_custom_call.1} parent=1 // loop_footer_branch
      %21 = sbr.rel target = $region3
    $region8: #{tpu_custom_call.1} parent=1 // loop_exit
      _
    %412 = vsyncpa [#allocation5], 1
    %s413 = scalar_lea.sflag [#allocation5], 1
    %414 = vsyncpa %s413, 1
    %415 = vsyncpa [#allocation6], 1
    %s416 = scalar_lea.sflag [#allocation6], 1
    %417 = vsyncpa %s416, 1

</llo_original>
